<compile_context>
chip_gen: v7x
topology: tpu7x:2x2x1
jax: 0.10.0
libtpu: 0.0.40
codegen_flags: <defaults>
</compile_context>

<pallas_src>
import jax
import jax.numpy as jnp
from jax.experimental import pallas as pl
from jax.experimental.pallas import tpu as pltpu

EPSILON = 1e-5
_LANE = 1024  # lane-dense slab width (8 lanes-groups of 128 per f32 vreg)


def _cdiv(a, b):
    return -(-a // b)


def _make_dice_kernel(tile_rows, lane, valid_rows, k_steps, ragged):
    """Build the per-block kernel; static params are baked in via closure."""

    def kernel(pred_ref, targ_ref, inter_out, union_out, inter_acc, union_acc):
        p_slab = pl.program_id(0)
        k = pl.program_id(1)

        @pl.when(k == 0)
        def _init():
            inter_acc[...] = jnp.zeros_like(inter_acc)
            union_acc[...] = jnp.zeros_like(union_acc)

        x = pred_ref[...].astype(jnp.float32)
        t = targ_ref[...].astype(jnp.float32)
        # sigmoid(x) == 0.5 * tanh(0.5 * x) + 0.5 : single EUP push + two VPU
        # ops instead of exp + divide; the EUP slot is otherwise idle here.
        p = 0.5 * jnp.tanh(0.5 * x) + 0.5

        def _accumulate(p_, t_):
            # Sublane partial reduce first (pure VPU adds across vreg
            # row-groups) so the RMW accumulator is only one vreg tall.
            pt = (p_ * t_).reshape(tile_rows // 8, 8, lane)
            pu = (p_ + t_).reshape(tile_rows // 8, 8, lane)
            inter_acc[...] += jnp.sum(pt, axis=0)
            union_acc[...] += jnp.sum(pu, axis=0)

        if ragged:
            # Boundary / over-allocated blocks: Pallas clips the DMA, so rows
            # at or beyond `valid_rows` contain garbage -> mask both operands.
            start_row = (p_slab * k_steps + k) * tile_rows
            is_partial = start_row + tile_rows > valid_rows

            @pl.when(jnp.logical_not(is_partial))
            def _full():
                _accumulate(p, t)

            @pl.when(is_partial)
            def _partial():
                rid = start_row + jax.lax.broadcasted_iota(
                    jnp.int32, (tile_rows, lane), 0)
                m = rid < valid_rows
                _accumulate(jnp.where(m, p, 0.0), jnp.where(m, t, 0.0))
        else:
            _accumulate(p, t)

        @pl.when(k == pl.num_programs(1) - 1)
        def _finalize():
            # Single cross-lane/sublane reduce per parallel slab.
            inter_out[...] = jnp.sum(inter_acc[...]).reshape(1, 1, 1)
            union_out[...] = jnp.sum(union_acc[...]).reshape(1, 1, 1)

    return kernel


def _dice_partials(pred2d, targ2d, rows, lane, tile_rows, max_parallel):
    """Run the Pallas kernel over the (rows, lane) slab -> (I, U) partials."""
    tr = min(tile_rows, _cdiv(rows, 8) * 8)
    tr = max(8, (tr // 8) * 8)              # multiple of 8 sublanes
    n_row_blocks = _cdiv(rows, tr)
    n_par = max(1, min(max_parallel, n_row_blocks))
    k_steps = _cdiv(n_row_blocks, n_par)
    last_block = n_row_blocks - 1
    needs_clamp = (n_par * k_steps) != n_row_blocks
    ragged = needs_clamp or (rows % tr != 0)

    if needs_clamp:
        # Keep every block index in-bounds; over-shooting grid steps re-read
        # the last block and are fully masked in-kernel (zero contribution).
        def in_map(p, k, _K=k_steps, _last=last_block):
            return (jnp.minimum(p * _K + k, _last), 0)
    else:
        def in_map(p, k, _K=k_steps):
            return (p * _K + k, 0)

    kernel = _make_dice_kernel(tr, lane, rows, k_steps, ragged)

    n_elems = rows * lane
    bytes_in = int(pred2d.size) * pred2d.dtype.itemsize \
        + int(targ2d.size) * targ2d.dtype.itemsize
    cost = pl.CostEstimate(flops=6 * n_elems, transcendentals=n_elems,
                           bytes_accessed=int(bytes_in) + 8 * n_par)

    inter_part, union_part = pl.pallas_call(
        kernel,
        out_shape=(
            jax.ShapeDtypeStruct((n_par, 1, 1), jnp.float32),
            jax.ShapeDtypeStruct((n_par, 1, 1), jnp.float32),
        ),
        grid_spec=pltpu.PrefetchScalarGridSpec(
            num_scalar_prefetch=0,
            grid=(n_par, k_steps),
            in_specs=[
                pl.BlockSpec((tr, lane), in_map),
                pl.BlockSpec((tr, lane), in_map),
            ],
            out_specs=[
                pl.BlockSpec((1, 1, 1), lambda p, k: (p, 0, 0)),
                pl.BlockSpec((1, 1, 1), lambda p, k: (p, 0, 0)),
            ],
            scratch_shapes=[
                pltpu.VMEM((8, lane), jnp.float32),  # intersection accumulator
                pltpu.VMEM((8, lane), jnp.float32),  # union accumulator
            ],
        ),
        compiler_params=pltpu.CompilerParams(
            dimension_semantics=("parallel", "arbitrary"),
            vmem_limit_bytes=48 * 1024 * 1024,
        ),
        cost_estimate=cost,
    )(pred2d, targ2d)

    return jnp.sum(inter_part), jnp.sum(union_part)


def dice_loss(predict, target, *, tile_rows=512, max_parallel=2):
    assert predict.shape == target.shape, (
        "the size of predict and target must be equal.")
    total = int(predict.size)
    lane = _LANE

    pred_flat = predict.reshape(-1)
    targ_flat = target.reshape(-1)

    rows = total // lane
    main = rows * lane
    rem = total - main

    intersection = jnp.zeros((), jnp.float32)
    union = jnp.zeros((), jnp.float32)

    if rem:
        # Sub-lane tail (< 1024 elements): tiny, plain jnp — avoids padding.
        tp = jax.nn.sigmoid(pred_flat[main:].astype(jnp.float32))
        tt = targ_flat[main:].astype(jnp.float32)
        intersection = intersection + jnp.sum(tp * tt)
        union = union + jnp.sum(tp + tt)

    if rows > 0:
        if rem:
            # Non-multiple-of-1024 totals pay one prefix-slice copy of the
            # main slab; the (common) divisible case below is a free bitcast.
            pred2d = pred_flat[:main].reshape(rows, lane)
            targ2d = targ_flat[:main].reshape(rows, lane)
        else:
            pred2d = pred_flat.reshape(rows, lane)
            targ2d = targ_flat.reshape(rows, lane)
        ki, ku = _dice_partials(pred2d, targ2d, rows, lane,
                                tile_rows, max_parallel)
        intersection = intersection + ki
        union = union + ku

    return 1.0 - (2.0 * intersection + EPSILON) / (union + EPSILON)


def _dice_loss_ref(predict, target):
    num = predict.shape[0]
    pre = jax.nn.sigmoid(predict).reshape(num, -1)
    tar = target.reshape(num, -1)
    intersection = (pre * tar).sum(-1).sum()
    union = (pre + tar).sum(-1).sum()
    return 1.0 - (2.0 * intersection + EPSILON) / (union + EPSILON)


if __name__ == "__main__":
    key = jax.random.PRNGKey(0)
    k1, k2, k3, k4, k5, k6 = jax.random.split(key, 6)

    # Primary: NCHW batch=2, channels=4, spatial=16x16 (2048 elems, lane
    # divisible; the single 8-row block is partial -> exercises the mask).
    predict = jax.random.normal(k1, (2, 4, 16, 16), dtype=jnp.float32)
    target = (jax.random.uniform(k2, (2, 4, 16, 16)) > 0.5).astype(jnp.float32)
    loss = dice_loss(predict, target)
    jax.block_until_ready(loss)
    ref = _dice_loss_ref(predict, target)
    assert jnp.allclose(loss, ref, atol=1e-5, rtol=1e-5), (loss, ref)

    # Ragged total (not a multiple of 1024): sub-lane tail handled in jnp.
    predict2 = jax.random.normal(k3, (2, 3, 17, 19), dtype=jnp.float32)
    target2 = (jax.random.uniform(k4, (2, 3, 17, 19)) > 0.5).astype(jnp.float32)
    loss2 = dice_loss(predict2, target2)
    jax.block_until_ready(loss2)
    ref2 = _dice_loss_ref(predict2, target2)
    assert jnp.allclose(loss2, ref2, atol=1e-5, rtol=1e-5), (loss2, ref2)

    # Larger lane-divisible case with an odd number of 512-row blocks:
    # exercises the unmasked fast path, the 2-slab parallel grid and the
    # clamped index map (fully-masked overshoot block).
    predict3 = jax.random.normal(k5, (6, 16, 128, 128), dtype=jnp.float32)
    target3 = (jax.random.uniform(k6, (6, 16, 128, 128)) > 0.5).astype(jnp.float32)
    loss3 = dice_loss(predict3, target3)
    jax.block_until_ready(loss3)
    ref3 = _dice_loss_ref(predict3, target3)
    assert jnp.allclose(loss3, ref3, atol=1e-4, rtol=1e-4), (loss3, ref3)

    print("KERNEL_OK")
</pallas_src>

<mosaic_0001>
module attributes {stable_mosaic.version = 11 : i64} {
  func.func @kernel(%arg0: i32, %arg1: i32, %arg2: memref<8x1024xf32, #tpu.memory_space<vmem>>, %arg3: memref<8x1024xf32, #tpu.memory_space<vmem>>, %arg4: memref<1x1x1xf32, #tpu.memory_space<vmem>>, %arg5: memref<1x1x1xf32, #tpu.memory_space<vmem>>, %arg6: memref<8x1024xf32, #tpu.memory_space<vmem>>, %arg7: memref<8x1024xf32, #tpu.memory_space<vmem>>) attributes {dimension_semantics = [#tpu.dimension_semantics<parallel>, #tpu.dimension_semantics<arbitrary>], iteration_bounds = array<i64: 1, 1>, scalar_prefetch = 0 : i64, scratch_operands = 2 : i64, tpu.core_type = #tpu.core_type<tc>, window_params = [{transform_indices = @transform_0, window_bounds = array<i64: 8, 1024>}, {transform_indices = @transform_1, window_bounds = array<i64: 8, 1024>}, {transform_indices = @transform_2, window_bounds = array<i64: 1, 1, 1>}, {transform_indices = @transform_3, window_bounds = array<i64: 1, 1, 1>}]} {
    %c0_i32 = arith.constant 0 : i32
    %0 = arith.cmpi eq, %arg1, %c0_i32 : i32
    %1 = arith.extui %0 : i1 to i32
    %c0_i32_0 = arith.constant 0 : i32
    %2 = arith.cmpi ne, %1, %c0_i32_0 : i32
    scf.if %2 {
      %cst_11 = arith.constant 0.000000e+00 : f32
      %25 = vector.broadcast %cst_11 : f32 to vector<8x1024xf32>
      %c0_12 = arith.constant 0 : index
      %c0_13 = arith.constant 0 : index
      %26 = vector.load %arg6[%c0_12, %c0_13] : memref<8x1024xf32, #tpu.memory_space<vmem>>, vector<8x1024xf32>
      tpu.vector_store %arg6[%c0_12, %c0_13], %25 {strides = array<i32>} : memref<8x1024xf32, #tpu.memory_space<vmem>>, vector<8x1024xf32>,
      %cst_14 = arith.constant 0.000000e+00 : f32
      %27 = vector.broadcast %cst_14 : f32 to vector<8x1024xf32>
      %c0_15 = arith.constant 0 : index
      %c0_16 = arith.constant 0 : index
      %28 = vector.load %arg7[%c0_15, %c0_16] : memref<8x1024xf32, #tpu.memory_space<vmem>>, vector<8x1024xf32>
      tpu.vector_store %arg7[%c0_15, %c0_16], %27 {strides = array<i32>} : memref<8x1024xf32, #tpu.memory_space<vmem>>, vector<8x1024xf32>,
    } else {
    }
    %c0 = arith.constant 0 : index
    %c0_1 = arith.constant 0 : index
    %3 = vector.load %arg2[%c0, %c0_1] : memref<8x1024xf32, #tpu.memory_space<vmem>>, vector<8x1024xf32>
    %c0_2 = arith.constant 0 : index
    %c0_3 = arith.constant 0 : index
    %4 = vector.load %arg3[%c0_2, %c0_3] : memref<8x1024xf32, #tpu.memory_space<vmem>>, vector<8x1024xf32>
    %cst = arith.constant 5.000000e-01 : f32
    %5 = vector.broadcast %cst : f32 to vector<8x1024xf32>
    %6 = arith.mulf %5, %3 : vector<8x1024xf32>
    %7 = math.tanh %6 : vector<8x1024xf32>
    %cst_4 = arith.constant 5.000000e-01 : f32
    %8 = vector.broadcast %cst_4 : f32 to vector<8x1024xf32>
    %9 = arith.mulf %8, %7 : vector<8x1024xf32>
    %cst_5 = arith.constant 5.000000e-01 : f32
    %10 = vector.broadcast %cst_5 : f32 to vector<8x1024xf32>
    %11 = arith.addf %9, %10 : vector<8x1024xf32>
    %c1_i32 = arith.constant 1 : i32
    %12 = arith.muli %arg0, %c1_i32 : i32
    %13 = arith.addi %12, %arg1 : i32
    %c8_i32 = arith.constant 8 : i32
    %14 = arith.muli %13, %c8_i32 : i32
    %c8_i32_6 = arith.constant 8 : i32
    %15 = arith.addi %14, %c8_i32_6 : i32
    %c2_i32 = arith.constant 2 : i32
    %16 = arith.cmpi sgt, %15, %c2_i32 : i32
    %true = arith.constant true
    %17 = arith.xori %16, %true : i1
    %18 = arith.extui %17 : i1 to i32
    %c0_i32_7 = arith.constant 0 : i32
    %19 = arith.cmpi ne, %18, %c0_i32_7 : i32
    scf.if %19 {
      %25 = arith.mulf %11, %4 : vector<8x1024xf32>
      %26 = vector.shape_cast %25 : vector<8x1024xf32> to vector<1x8x1024xf32>
      %27 = arith.addf %11, %4 : vector<8x1024xf32>
      %28 = vector.shape_cast %27 : vector<8x1024xf32> to vector<1x8x1024xf32>
      %c0_11 = arith.constant 0 : index
      %c0_12 = arith.constant 0 : index
      %29 = vector.load %arg6[%c0_11, %c0_12] : memref<8x1024xf32, #tpu.memory_space<vmem>>, vector<8x1024xf32>
      %cst_13 = arith.constant dense<0.000000e+00> : vector<8x1024xf32>
      %30 = vector.multi_reduction <add>, %26, %cst_13 [0] : vector<1x8x1024xf32> to vector<8x1024xf32>
      %31 = arith.addf %29, %30 : vector<8x1024xf32>
      %c0_14 = arith.constant 0 : index
      %c0_15 = arith.constant 0 : index
      %32 = vector.load %arg6[%c0_14, %c0_15] : memref<8x1024xf32, #tpu.memory_space<vmem>>, vector<8x1024xf32>
      tpu.vector_store %arg6[%c0_14, %c0_15], %31 {strides = array<i32>} : memref<8x1024xf32, #tpu.memory_space<vmem>>, vector<8x1024xf32>,
      %c0_16 = arith.constant 0 : index
      %c0_17 = arith.constant 0 : index
      %33 = vector.load %arg7[%c0_16, %c0_17] : memref<8x1024xf32, #tpu.memory_space<vmem>>, vector<8x1024xf32>
      %cst_18 = arith.constant dense<0.000000e+00> : vector<8x1024xf32>
      %34 = vector.multi_reduction <add>, %28, %cst_18 [0] : vector<1x8x1024xf32> to vector<8x1024xf32>
      %35 = arith.addf %33, %34 : vector<8x1024xf32>
      %c0_19 = arith.constant 0 : index
      %c0_20 = arith.constant 0 : index
      %36 = vector.load %arg7[%c0_19, %c0_20] : memref<8x1024xf32, #tpu.memory_space<vmem>>, vector<8x1024xf32>
      tpu.vector_store %arg7[%c0_19, %c0_20], %35 {strides = array<i32>} : memref<8x1024xf32, #tpu.memory_space<vmem>>, vector<8x1024xf32>,
    } else {
    }
    %20 = arith.extui %16 : i1 to i32
    %c0_i32_8 = arith.constant 0 : i32
    %21 = arith.cmpi ne, %20, %c0_i32_8 : i32
    scf.if %21 {
      %25 = tpu.iota {dimensions = array<i32: 0>} : vector<8x1024xi32>
      %26 = vector.broadcast %14 : i32 to vector<8x1024xi32>
      %27 = arith.addi %26, %25 : vector<8x1024xi32>
      %c2_i32_11 = arith.constant 2 : i32
      %28 = vector.broadcast %c2_i32_11 : i32 to vector<8x1024xi32>
      %29 = arith.cmpi slt, %27, %28 : vector<8x1024xi32>
      %cst_12 = arith.constant 0.000000e+00 : f32
      %30 = vector.broadcast %cst_12 : f32 to vector<8x1024xf32>
      %31 = arith.select %29, %11, %30 : vector<8x1024xi1>, vector<8x1024xf32>
      %cst_13 = arith.constant 0.000000e+00 : f32
      %32 = vector.broadcast %cst_13 : f32 to vector<8x1024xf32>
      %33 = arith.select %29, %4, %32 : vector<8x1024xi1>, vector<8x1024xf32>
      %34 = arith.mulf %31, %33 : vector<8x1024xf32>
      %35 = vector.shape_cast %34 : vector<8x1024xf32> to vector<1x8x1024xf32>
      %36 = arith.addf %31, %33 : vector<8x1024xf32>
      %37 = vector.shape_cast %36 : vector<8x1024xf32> to vector<1x8x1024xf32>
      %c0_14 = arith.constant 0 : index
      %c0_15 = arith.constant 0 : index
      %38 = vector.load %arg6[%c0_14, %c0_15] : memref<8x1024xf32, #tpu.memory_space<vmem>>, vector<8x1024xf32>
      %cst_16 = arith.constant dense<0.000000e+00> : vector<8x1024xf32>
      %39 = vector.multi_reduction <add>, %35, %cst_16 [0] : vector<1x8x1024xf32> to vector<8x1024xf32>
      %40 = arith.addf %38, %39 : vector<8x1024xf32>
      %c0_17 = arith.constant 0 : index
      %c0_18 = arith.constant 0 : index
      %41 = vector.load %arg6[%c0_17, %c0_18] : memref<8x1024xf32, #tpu.memory_space<vmem>>, vector<8x1024xf32>
      tpu.vector_store %arg6[%c0_17, %c0_18], %40 {strides = array<i32>} : memref<8x1024xf32, #tpu.memory_space<vmem>>, vector<8x1024xf32>,
      %c0_19 = arith.constant 0 : index
      %c0_20 = arith.constant 0 : index
      %42 = vector.load %arg7[%c0_19, %c0_20] : memref<8x1024xf32, #tpu.memory_space<vmem>>, vector<8x1024xf32>
      %cst_21 = arith.constant dense<0.000000e+00> : vector<8x1024xf32>
      %43 = vector.multi_reduction <add>, %37, %cst_21 [0] : vector<1x8x1024xf32> to vector<8x1024xf32>
      %44 = arith.addf %42, %43 : vector<8x1024xf32>
      %c0_22 = arith.constant 0 : index
      %c0_23 = arith.constant 0 : index
      %45 = vector.load %arg7[%c0_22, %c0_23] : memref<8x1024xf32, #tpu.memory_space<vmem>>, vector<8x1024xf32>
      tpu.vector_store %arg7[%c0_22, %c0_23], %44 {strides = array<i32>} : memref<8x1024xf32, #tpu.memory_space<vmem>>, vector<8x1024xf32>,
    } else {
    }
    %c0_i32_9 = arith.constant 0 : i32
    %22 = arith.cmpi eq, %arg1, %c0_i32_9 : i32
    %23 = arith.extui %22 : i1 to i32
    %c0_i32_10 = arith.constant 0 : i32
    %24 = arith.cmpi ne, %23, %c0_i32_10 : i32
    scf.if %24 {
      %c0_11 = arith.constant 0 : index
      %c0_12 = arith.constant 0 : index
      %25 = vector.load %arg6[%c0_11, %c0_12] : memref<8x1024xf32, #tpu.memory_space<vmem>>, vector<8x1024xf32>
      %26 = vector.shape_cast %25 : vector<8x1024xf32> to vector<1x8x1024xf32>
      %cst_13 = arith.constant dense<0.000000e+00> : vector<1xf32>
      %27 = vector.multi_reduction <add>, %26, %cst_13 [1, 2] : vector<1x8x1024xf32> to vector<1xf32>
      %28 = vector.shape_cast %27 : vector<1xf32> to vector<1x1x1xf32>
      %29 = vector.extract %28[0, 0, 0] : f32 from vector<1x1x1xf32>
      %30 = vector.broadcast %29 : f32 to vector<1x1x1xf32>
      %c0_14 = arith.constant 0 : index
      %c0_15 = arith.constant 0 : index
      %c0_16 = arith.constant 0 : index
      %31 = vector.load %arg4[%c0_14, %c0_15, %c0_16] : memref<1x1x1xf32, #tpu.memory_space<vmem>>, vector<1x1x1xf32>
      tpu.vector_store %arg4[%c0_14, %c0_15, %c0_16], %30 {strides = array<i32>} : memref<1x1x1xf32, #tpu.memory_space<vmem>>, vector<1x1x1xf32>,
      %c0_17 = arith.constant 0 : index
      %c0_18 = arith.constant 0 : index
      %32 = vector.load %arg7[%c0_17, %c0_18] : memref<8x1024xf32, #tpu.memory_space<vmem>>, vector<8x1024xf32>
      %33 = vector.shape_cast %32 : vector<8x1024xf32> to vector<1x8x1024xf32>
      %cst_19 = arith.constant dense<0.000000e+00> : vector<1xf32>
      %34 = vector.multi_reduction <add>, %33, %cst_19 [1, 2] : vector<1x8x1024xf32> to vector<1xf32>
      %35 = vector.shape_cast %34 : vector<1xf32> to vector<1x1x1xf32>
      %36 = vector.extract %35[0, 0, 0] : f32 from vector<1x1x1xf32>
      %37 = vector.broadcast %36 : f32 to vector<1x1x1xf32>
      %c0_20 = arith.constant 0 : index
      %c0_21 = arith.constant 0 : index
      %c0_22 = arith.constant 0 : index
      %38 = vector.load %arg5[%c0_20, %c0_21, %c0_22] : memref<1x1x1xf32, #tpu.memory_space<vmem>>, vector<1x1x1xf32>
      tpu.vector_store %arg5[%c0_20, %c0_21, %c0_22], %37 {strides = array<i32>} : memref<1x1x1xf32, #tpu.memory_space<vmem>>, vector<1x1x1xf32>,
    } else {
    }
    return
  }
  func.func @transform_0(%arg0: i32, %arg1: i32) -> (i32, i32) {
    %c1_i32 = arith.constant 1 : i32
    %0 = arith.muli %arg0, %c1_i32 : i32
    %1 = arith.addi %0, %arg1 : i32
    %c0_i32 = arith.constant 0 : i32
    %c0_i32_0 = arith.constant 0 : i32
    return %1, %c0_i32 : i32, i32
  }
  func.func @transform_1(%arg0: i32, %arg1: i32) -> (i32, i32) {
    %c1_i32 = arith.constant 1 : i32
    %0 = arith.muli %arg0, %c1_i32 : i32
    %1 = arith.addi %0, %arg1 : i32
    %c0_i32 = arith.constant 0 : i32
    %c0_i32_0 = arith.constant 0 : i32
    return %1, %c0_i32 : i32, i32
  }
  func.func @transform_2(%arg0: i32, %arg1: i32) -> (i32, i32, i32) {
    %c0_i32 = arith.constant 0 : i32
    %c0_i32_0 = arith.constant 0 : i32
    %c0_i32_1 = arith.constant 0 : i32
    return %arg0, %c0_i32, %c0_i32_0 : i32, i32, i32
  }
  func.func @transform_3(%arg0: i32, %arg1: i32) -> (i32, i32, i32) {
    %c0_i32 = arith.constant 0 : i32
    %c0_i32_0 = arith.constant 0 : i32
    %c0_i32_1 = arith.constant 0 : i32
    return %arg0, %c0_i32, %c0_i32_0 : i32, i32, i32
  }
}

</mosaic_0001>

<llo_original>
// kernel: tpu_custom_call.1
$region0: #{tpu_custom_call.1}
  #allocation0 [shape = 'u32[]', space=smem, size = 0x4, offset = 0x4, fixed_abs, tag = 'smem constant byte address 0x4 - core index']
  #allocation1 [shape = 'u32[144,128]{1,0:T(1,128)}', space=vmem, size = 0x12000, scoped, tag = 'internal scratch']
  #allocation2 [shape = 'f32[8,1024]{1,0:T(8,128)}', space=vmem, size = 0x8000, scoped, tag = 'scratch operand']
  #allocation3 [shape = 'f32[8,1024]{1,0:T(8,128)}', space=vmem, size = 0x8000, scoped, tag = 'scratch operand']
  %s0 = inlined_call_operand.hbm [shape: f32[2,1024], index: 0, kind: input, shape index: {}]
  %s1 = inlined_call_operand.hbm [shape: f32[2,1024], index: 1, kind: input, shape index: {}]
  %s2 = inlined_call_operand.hbm [shape: f32[1,1,1], index: 2, kind: output, shape index: {0}]
  %s3 = inlined_call_operand.hbm [shape: f32[1,1,1], index: 3, kind: output, shape index: {1}]
  %4 = xla_tuple %s2, %s3
  %s5 = sld [smem:[#allocation0]]
  $region50: #{tpu_custom_call.1} parent=0
    _
  %s7 = ssub.s32 1, %s5
  %s8 = scalar_select 0, %s7, %s5
  $region1: #{tpu_custom_call.1} parent=0
    #allocation4 [shape = 'u8[32768]{0}', space=vmem, size = 0x8000, scoped, tag = 'input window, operand 0, single buffered']
    #allocation5 [shape = 's32[1]{0}', space=sflag, size = 0x4, scoped, tag = 'scoped memory for tpu_custom_call.1']
    #allocation6 [shape = 's32[1]{0}', space=sflag, size = 0x4, scoped, tag = 'scoped memory for tpu_custom_call.1']
    #allocation7 [shape = 'u8[32768]{0}', space=vmem, size = 0x8000, scoped, tag = 'input window, operand 1, single buffered']
    #allocation8 [shape = 's32[1]{0}', space=sflag, size = 0x4, scoped, tag = 'scoped memory for tpu_custom_call.1']
    #allocation9 [shape = 'u8[512]{0}', space=vmem, size = 0x400, scoped, tag = 'output window, operand 0, single buffered']
    #allocation10 [shape = 'u8[512]{0}', space=vmem, size = 0x400, scoped, tag = 'output window, operand 1, single buffered']
    #allocation11 [shape = 's32[1]{0}', space=sflag, size = 0x4, scoped, tag = 'scoped memory for tpu_custom_call.1']
    %9 = vsyncpa [#allocation5], 0
    %10 = vsyncpa [#allocation8], 0
    %11 = vsyncpa [#allocation6], 0
    %12 = vsyncpa [#allocation11], 0
    // Predicated region
    $region2: #{tpu_custom_call.1} parent=1 // pred_check
      _
    $region3: #{tpu_custom_call.1} parent=1 // pred_check_branch
      %14 = sbr.rel (0) target = $region5
    $region4: #{tpu_custom_call.1} parent=1 // pred_region
      %s15 = sadd.s32 0, 0
      %s16 = smul.u32 4, %s15
      %s17 = ssub.s32 1, %s16
      %s18 = smul.u32 32, %s17
      %s19 = smul.u32 %s18, 8
      %s21 = ssub.s32 1024, %s19
      %22 = vsyncadd [#allocation5], %s21
      %p23 = scmp.ne.s32.totalorder 0, %s19
      %s24 = smul.addr %s16, 8
      %s25 = smul.addr %s24, 32
      %s26 = scalar_lea.hbm %s0, %s25
      %s27 = smul.u32 16, %s17
      %s28 = sshll.u32 [#allocation4], 4
      %s29 = int_to_ptr.vmem [resolvable:$true] %s28
      %s30 = sshll.u32 %s27, 4
      %34 = dma.hbm_to_vmem [thread:$0]  (%p23), %s26, %s30, %s29, [#allocation5], 256, 256, 16
    $region5: #{tpu_custom_call.1} parent=1 // pred_fallthru
      _
    // Predicated region
    $region6: #{tpu_custom_call.1} parent=1 // pred_check
      _
    $region7: #{tpu_custom_call.1} parent=1 // pred_check_branch
      %36 = sbr.rel (0) target = $region9
    $region8: #{tpu_custom_call.1} parent=1 // pred_region
      %s37 = sadd.s32 0, 0
      %s38 = smul.u32 4, %s37
      %s39 = ssub.s32 1, %s38
      %s40 = smul.u32 32, %s39
      %s41 = smul.u32 %s40, 8
      %s43 = ssub.s32 1024, %s41
      %44 = vsyncadd [#allocation8], %s43
      %p45 = scmp.ne.s32.totalorder 0, %s41
      %s46 = smul.addr %s38, 8
      %s47 = smul.addr %s46, 32
      %s48 = scalar_lea.hbm %s1, %s47
      %s49 = smul.u32 16, %s39
      %s50 = sshll.u32 [#allocation7], 4
      %s51 = int_to_ptr.vmem [resolvable:$true] %s50
      %s52 = sshll.u32 %s49, 4
      %56 = dma.hbm_to_vmem [thread:$0]  (%p45), %s48, %s52, %s51, [#allocation8], 256, 256, 16
    $region9: #{tpu_custom_call.1} parent=1 // pred_fallthru
      _
    // Predicated region
    $region10: #{tpu_custom_call.1} parent=1 // pred_check
      _
    $region11: #{tpu_custom_call.1} parent=1 // pred_check_branch
      %58 = sbr.rel (0) target = $region13
    $region12: #{tpu_custom_call.1} parent=1 // pred_region
      %59 = dma.done [#allocation5], 1024
    $region13: #{tpu_custom_call.1} parent=1 // pred_fallthru
      _
    // Predicated region
    $region14: #{tpu_custom_call.1} parent=1 // pred_check
      _
    $region15: #{tpu_custom_call.1} parent=1 // pred_check_branch
      %61 = sbr.rel (0) target = $region17
    $region16: #{tpu_custom_call.1} parent=1 // pred_region
      %62 = dma.done [#allocation8], 1024
    $region17: #{tpu_custom_call.1} parent=1 // pred_fallthru
      _
    %s63 = sadd.s32 0, 0
    %s64 = smul.u32 4, %s63
    %s65 = ssub.s32 1, %s64
    %s66 = smul.u32 32, %s65
    %s67 = smul.u32 %s66, 8
    %s68 = sadd.s32 0, 0
    %s69 = smul.u32 4, %s68
    %s70 = ssub.s32 1, %s69
    %s71 = smul.u32 32, %s70
    %s72 = smul.u32 %s71, 8
    %p73 = scmp.eq.s32.totalorder 0, 0
    // Predicated region
    $region18: #{tpu_custom_call.1} parent=1 // pred_check
      %p74 = pneg %p73
    $region19: #{tpu_custom_call.1} parent=1 // pred_check_branch
      %76 = sbr.rel (%p74) target = $region21
    $region20: #{tpu_custom_call.1} parent=1 // pred_region
      %77 = vst [vmem:[#allocation2] sm:$0xff] 0.0
      %78 = vst [vmem:[#allocation2 + $0x8] sm:$0xff] 0.0
      %79 = vst [vmem:[#allocation2 + $0x10] sm:$0xff] 0.0
      %80 = vst [vmem:[#allocation2 + $0x18] sm:$0xff] 0.0
      %81 = vst [vmem:[#allocation2 + $0x20] sm:$0xff] 0.0
      %82 = vst [vmem:[#allocation2 + $0x28] sm:$0xff] 0.0
      %83 = vst [vmem:[#allocation2 + $0x30] sm:$0xff] 0.0
      %84 = vst [vmem:[#allocation2 + $0x38] sm:$0xff] 0.0
      %85 = vst [vmem:[#allocation3] sm:$0xff] 0.0
      %86 = vst [vmem:[#allocation3 + $0x8] sm:$0xff] 0.0
      %87 = vst [vmem:[#allocation3 + $0x10] sm:$0xff] 0.0
      %88 = vst [vmem:[#allocation3 + $0x18] sm:$0xff] 0.0
      %89 = vst [vmem:[#allocation3 + $0x20] sm:$0xff] 0.0
      %90 = vst [vmem:[#allocation3 + $0x28] sm:$0xff] 0.0
      %91 = vst [vmem:[#allocation3 + $0x30] sm:$0xff] 0.0
      %92 = vst [vmem:[#allocation3 + $0x38] sm:$0xff] 0.0
    $region21: #{tpu_custom_call.1} parent=1 // pred_fallthru
      _
    %v93 = vld [vmem:[#allocation4] sm:$0xff]
    %v94 = vld [vmem:[#allocation4 + $0x8] sm:$0xff]
    %v95 = vld [vmem:[#allocation4 + $0x10] sm:$0xff]
    %v96 = vld [vmem:[#allocation4 + $0x18] sm:$0xff]
    %v97 = vld [vmem:[#allocation4 + $0x20] sm:$0xff]
    %v98 = vld [vmem:[#allocation4 + $0x28] sm:$0xff]
    %v99 = vld [vmem:[#allocation4 + $0x30] sm:$0xff]
    %v100 = vld [vmem:[#allocation4 + $0x38] sm:$0xff]
    %v101 = vld [vmem:[#allocation7] sm:$0xff]
    %v102 = vld [vmem:[#allocation7 + $0x8] sm:$0xff]
    %v103 = vld [vmem:[#allocation7 + $0x10] sm:$0xff]
    %v104 = vld [vmem:[#allocation7 + $0x18] sm:$0xff]
    %v105 = vld [vmem:[#allocation7 + $0x20] sm:$0xff]
    %v106 = vld [vmem:[#allocation7 + $0x28] sm:$0xff]
    %v107 = vld [vmem:[#allocation7 + $0x30] sm:$0xff]
    %v108 = vld [vmem:[#allocation7 + $0x38] sm:$0xff]
    %v109 = vmul.f32 %v93, 0.5
    %v110 = vmul.f32 %v94, 0.5
    %v111 = vmul.f32 %v95, 0.5
    %v112 = vmul.f32 %v96, 0.5
    %v113 = vmul.f32 %v97, 0.5
    %v114 = vmul.f32 %v98, 0.5
    %v115 = vmul.f32 %v99, 0.5
    %v116 = vmul.f32 %v100, 0.5
    %v117 = vtanh.pop %v109
    %v118 = vtanh.pop %v110
    %v119 = vtanh.pop %v111
    %v120 = vtanh.pop %v112
    %v121 = vtanh.pop %v113
    %v122 = vtanh.pop %v114
    %v123 = vtanh.pop %v115
    %v124 = vtanh.pop %v116
    %v125 = vmul.f32 %v117, 0.5
    %v126 = vmul.f32 %v118, 0.5
    %v127 = vmul.f32 %v119, 0.5
    %v128 = vmul.f32 %v120, 0.5
    %v129 = vmul.f32 %v121, 0.5
    %v130 = vmul.f32 %v122, 0.5
    %v131 = vmul.f32 %v123, 0.5
    %v132 = vmul.f32 %v124, 0.5
    %v133 = vadd.f32 %v125, 0.5
    %v134 = vadd.f32 %v126, 0.5
    %v135 = vadd.f32 %v127, 0.5
    %v136 = vadd.f32 %v128, 0.5
    %v137 = vadd.f32 %v129, 0.5
    %v138 = vadd.f32 %v130, 0.5
    %v139 = vadd.f32 %v131, 0.5
    %v140 = vadd.f32 %v132, 0.5
    %s141 = sadd.s32 0, 0
    %s142 = smul.u32 %s141, 8
    %s143 = sadd.s32 %s142, 8
    %p144 = scmp.gt.s32.totalorder %s143, 2
    %p145 = scmp.le.s32.totalorder %s143, 2
    // Predicated region
    $region22: #{tpu_custom_call.1} parent=1 // pred_check
      %p146 = pneg %p145
    $region23: #{tpu_custom_call.1} parent=1 // pred_check_branch
      %148 = sbr.rel (%p146) target = $region25
    $region24: #{tpu_custom_call.1} parent=1 // pred_region
      %v149 = vmul.f32 %v133, %v101
      %v150 = vmul.f32 %v134, %v102
      %v151 = vmul.f32 %v135, %v103
      %v152 = vmul.f32 %v136, %v104
      %v153 = vmul.f32 %v137, %v105
      %v154 = vmul.f32 %v138, %v106
      %v155 = vmul.f32 %v139, %v107
      %v156 = vmul.f32 %v140, %v108
      %v157 = vadd.f32 %v133, %v101
      %v158 = vadd.f32 %v134, %v102
      %v159 = vadd.f32 %v135, %v103
      %v160 = vadd.f32 %v136, %v104
      %v161 = vadd.f32 %v137, %v105
      %v162 = vadd.f32 %v138, %v106
      %v163 = vadd.f32 %v139, %v107
      %v164 = vadd.f32 %v140, %v108
      %v165 = vld [vmem:[#allocation2] sm:$0xff]
      %v166 = vld [vmem:[#allocation2 + $0x8] sm:$0xff]
      %v167 = vld [vmem:[#allocation2 + $0x10] sm:$0xff]
      %v168 = vld [vmem:[#allocation2 + $0x18] sm:$0xff]
      %v169 = vld [vmem:[#allocation2 + $0x20] sm:$0xff]
      %v170 = vld [vmem:[#allocation2 + $0x28] sm:$0xff]
      %v171 = vld [vmem:[#allocation2 + $0x30] sm:$0xff]
      %v172 = vld [vmem:[#allocation2 + $0x38] sm:$0xff]
      %v173 = vadd.f32 %v149, 0.0
      %v174 = vadd.f32 %v150, 0.0
      %v175 = vadd.f32 %v151, 0.0
      %v176 = vadd.f32 %v152, 0.0
      %v177 = vadd.f32 %v153, 0.0
      %v178 = vadd.f32 %v154, 0.0
      %v179 = vadd.f32 %v155, 0.0
      %v180 = vadd.f32 %v156, 0.0
      %v189 = vcombine.low %v173, %v175
      %v190 = vcombine.high %v173, %v175
      %v191 = vcombine.low %v177, %v179
      %v192 = vcombine.high %v177, %v179
      %v194 = vunpack.c.l.s4 1983009808
      %v195 = vunpack.c.0.s8 %v194
      %v196 = vlaneseq
      %v197 = vshrl.u32 %v196, 7
      %v198 = vsub.s32 %v195, %v197
      %v199 = vrot.slane %v189, %v198
      %v201 = vunpack.c.l.s4 1983009808
      %v202 = vunpack.c.0.s8 %v201
      %v203 = vlaneseq
      %v204 = vshrl.u32 %v203, 7
      %v205 = vsub.s32 %v202, %v204
      %v206 = vrot.slane %v190, %v205
      %v208 = vunpack.c.l.s4 1983009808
      %v209 = vunpack.c.0.s8 %v208
      %v210 = vlaneseq
      %v211 = vshrl.u32 %v210, 7
      %v212 = vsub.s32 %v209, %v211
      %v213 = vrot.slane %v191, %v212
      %v215 = vunpack.c.l.s4 1983009808
      %v216 = vunpack.c.0.s8 %v215
      %v217 = vlaneseq
      %v218 = vshrl.u32 %v217, 7
      %v219 = vsub.s32 %v216, %v218
      %v220 = vrot.slane %v192, %v219
      %v221 = vcombine.low %v199, %v213
      %v222 = vcombine.high %v199, %v213
      %v223 = vcombine.low %v206, %v220
      %v224 = vcombine.high %v206, %v220
      %v225 = vcombine.low %v174, %v176
      %v226 = vcombine.high %v174, %v176
      %v227 = vcombine.low %v178, %v180
      %v228 = vcombine.high %v178, %v180
      %v230 = vunpack.c.l.s4 1983009808
      %v231 = vunpack.c.0.s8 %v230
      %v232 = vlaneseq
      %v233 = vshrl.u32 %v232, 7
      %v234 = vsub.s32 %v231, %v233
      %v235 = vrot.slane %v225, %v234
      %v237 = vunpack.c.l.s4 1983009808
      %v238 = vunpack.c.0.s8 %v237
      %v239 = vlaneseq
      %v240 = vshrl.u32 %v239, 7
      %v241 = vsub.s32 %v238, %v240
      %v242 = vrot.slane %v226, %v241
      %v244 = vunpack.c.l.s4 1983009808
      %v245 = vunpack.c.0.s8 %v244
      %v246 = vlaneseq
      %v247 = vshrl.u32 %v246, 7
      %v248 = vsub.s32 %v245, %v247
      %v249 = vrot.slane %v227, %v248
      %v251 = vunpack.c.l.s4 1983009808
      %v252 = vunpack.c.0.s8 %v251
      %v253 = vlaneseq
      %v254 = vshrl.u32 %v253, 7
      %v255 = vsub.s32 %v252, %v254
      %v256 = vrot.slane %v228, %v255
      %v257 = vcombine.low %v235, %v249
      %v258 = vcombine.high %v235, %v249
      %v259 = vcombine.low %v242, %v256
      %v260 = vcombine.high %v242, %v256
      %v269 = vadd.f32 %v165, %v221
      %v270 = vadd.f32 %v166, %v222
      %v271 = vadd.f32 %v167, %v223
      %v272 = vadd.f32 %v168, %v224
      %v273 = vadd.f32 %v169, %v257
      %v274 = vadd.f32 %v170, %v258
      %v275 = vadd.f32 %v171, %v259
      %v276 = vadd.f32 %v172, %v260
      %277 = vst [vmem:[#allocation2] sm:$0xff] %v269
      %278 = vst [vmem:[#allocation2 + $0x8] sm:$0xff] %v270
      %279 = vst [vmem:[#allocation2 + $0x10] sm:$0xff] %v271
      %280 = vst [vmem:[#allocation2 + $0x18] sm:$0xff] %v272
      %281 = vst [vmem:[#allocation2 + $0x20] sm:$0xff] %v273
      %282 = vst [vmem:[#allocation2 + $0x28] sm:$0xff] %v274
      %283 = vst [vmem:[#allocation2 + $0x30] sm:$0xff] %v275
      %284 = vst [vmem:[#allocation2 + $0x38] sm:$0xff] %v276
      %v285 = vld [vmem:[#allocation3] sm:$0xff]
      %v286 = vld [vmem:[#allocation3 + $0x8] sm:$0xff]
      %v287 = vld [vmem:[#allocation3 + $0x10] sm:$0xff]
      %v288 = vld [vmem:[#allocation3 + $0x18] sm:$0xff]
      %v289 = vld [vmem:[#allocation3 + $0x20] sm:$0xff]
      %v290 = vld [vmem:[#allocation3 + $0x28] sm:$0xff]
      %v291 = vld [vmem:[#allocation3 + $0x30] sm:$0xff]
      %v292 = vld [vmem:[#allocation3 + $0x38] sm:$0xff]
      %v293 = vadd.f32 %v157, 0.0
      %v294 = vadd.f32 %v158, 0.0
      %v295 = vadd.f32 %v159, 0.0
      %v296 = vadd.f32 %v160, 0.0
      %v297 = vadd.f32 %v161, 0.0
      %v298 = vadd.f32 %v162, 0.0
      %v299 = vadd.f32 %v163, 0.0
      %v300 = vadd.f32 %v164, 0.0
      %v309 = vcombine.low %v293, %v295
      %v310 = vcombine.high %v293, %v295
      %v311 = vcombine.low %v297, %v299
      %v312 = vcombine.high %v297, %v299
      %v314 = vunpack.c.l.s4 1983009808
      %v315 = vunpack.c.0.s8 %v314
      %v316 = vlaneseq
      %v317 = vshrl.u32 %v316, 7
      %v318 = vsub.s32 %v315, %v317
      %v319 = vrot.slane %v309, %v318
      %v321 = vunpack.c.l.s4 1983009808
      %v322 = vunpack.c.0.s8 %v321
      %v323 = vlaneseq
      %v324 = vshrl.u32 %v323, 7
      %v325 = vsub.s32 %v322, %v324
      %v326 = vrot.slane %v310, %v325
      %v328 = vunpack.c.l.s4 1983009808
      %v329 = vunpack.c.0.s8 %v328
      %v330 = vlaneseq
      %v331 = vshrl.u32 %v330, 7
      %v332 = vsub.s32 %v329, %v331
      %v333 = vrot.slane %v311, %v332
      %v335 = vunpack.c.l.s4 1983009808
      %v336 = vunpack.c.0.s8 %v335
      %v337 = vlaneseq
      %v338 = vshrl.u32 %v337, 7
      %v339 = vsub.s32 %v336, %v338
      %v340 = vrot.slane %v312, %v339
      %v341 = vcombine.low %v319, %v333
      %v342 = vcombine.high %v319, %v333
      %v343 = vcombine.low %v326, %v340
      %v344 = vcombine.high %v326, %v340
      %v345 = vcombine.low %v294, %v296
      %v346 = vcombine.high %v294, %v296
      %v347 = vcombine.low %v298, %v300
      %v348 = vcombine.high %v298, %v300
      %v350 = vunpack.c.l.s4 1983009808
      %v351 = vunpack.c.0.s8 %v350
      %v352 = vlaneseq
      %v353 = vshrl.u32 %v352, 7
      %v354 = vsub.s32 %v351, %v353
      %v355 = vrot.slane %v345, %v354
      %v357 = vunpack.c.l.s4 1983009808
      %v358 = vunpack.c.0.s8 %v357
      %v359 = vlaneseq
      %v360 = vshrl.u32 %v359, 7
      %v361 = vsub.s32 %v358, %v360
      %v362 = vrot.slane %v346, %v361
      %v364 = vunpack.c.l.s4 1983009808
      %v365 = vunpack.c.0.s8 %v364
      %v366 = vlaneseq
      %v367 = vshrl.u32 %v366, 7
      %v368 = vsub.s32 %v365, %v367
      %v369 = vrot.slane %v347, %v368
      %v371 = vunpack.c.l.s4 1983009808
      %v372 = vunpack.c.0.s8 %v371
      %v373 = vlaneseq
      %v374 = vshrl.u32 %v373, 7
      %v375 = vsub.s32 %v372, %v374
      %v376 = vrot.slane %v348, %v375
      %v377 = vcombine.low %v355, %v369
      %v378 = vcombine.high %v355, %v369
      %v379 = vcombine.low %v362, %v376
      %v380 = vcombine.high %v362, %v376
      %v389 = vadd.f32 %v285, %v341
      %v390 = vadd.f32 %v286, %v342
      %v391 = vadd.f32 %v287, %v343
      %v392 = vadd.f32 %v288, %v344
      %v393 = vadd.f32 %v289, %v377
      %v394 = vadd.f32 %v290, %v378
      %v395 = vadd.f32 %v291, %v379
      %v396 = vadd.f32 %v292, %v380
      %397 = vst [vmem:[#allocation3] sm:$0xff] %v389
      %398 = vst [vmem:[#allocation3 + $0x8] sm:$0xff] %v390
      %399 = vst [vmem:[#allocation3 + $0x10] sm:$0xff] %v391
      %400 = vst [vmem:[#allocation3 + $0x18] sm:$0xff] %v392
      %401 = vst [vmem:[#allocation3 + $0x20] sm:$0xff] %v393
      %402 = vst [vmem:[#allocation3 + $0x28] sm:$0xff] %v394
      %403 = vst [vmem:[#allocation3 + $0x30] sm:$0xff] %v395
      %404 = vst [vmem:[#allocation3 + $0x38] sm:$0xff] %v396
    $region25: #{tpu_custom_call.1} parent=1 // pred_fallthru
      _
    // Predicated region
    $region26: #{tpu_custom_call.1} parent=1 // pred_check
      %p405 = pneg %p144
    $region27: #{tpu_custom_call.1} parent=1 // pred_check_branch
      %407 = sbr.rel (%p405) target = $region29
    $region28: #{tpu_custom_call.1} parent=1 // pred_region
      %v408 = vlaneseq
      %v409 = vshrl.u32 %v408, 7
      %v410 = vstv %s142
      %v411 = vadd.s32 %v410, %v409
      %vm412 = vcmp.lt.s32.totalorder %v411, 2
      %v421 = vcombine.low %v133, %v135
      %v422 = vcombine.high %v133, %v135
      %v423 = vcombine.low %v137, %v139
      %v424 = vcombine.high %v137, %v139
      %v426 = vunpack.c.l.s4 1983009808
      %v427 = vunpack.c.0.s8 %v426
      %v428 = vlaneseq
      %v429 = vshrl.u32 %v428, 7
      %v430 = vsub.s32 %v427, %v429
      %v431 = vrot.slane %v421, %v430
      %v433 = vunpack.c.l.s4 1983009808
      %v434 = vunpack.c.0.s8 %v433
      %v435 = vlaneseq
      %v436 = vshrl.u32 %v435, 7
      %v437 = vsub.s32 %v434, %v436
      %v438 = vrot.slane %v422, %v437
      %v440 = vunpack.c.l.s4 1983009808
      %v441 = vunpack.c.0.s8 %v440
      %v442 = vlaneseq
      %v443 = vshrl.u32 %v442, 7
      %v444 = vsub.s32 %v441, %v443
      %v445 = vrot.slane %v423, %v444
      %v447 = vunpack.c.l.s4 1983009808
      %v448 = vunpack.c.0.s8 %v447
      %v449 = vlaneseq
      %v450 = vshrl.u32 %v449, 7
      %v451 = vsub.s32 %v448, %v450
      %v452 = vrot.slane %v424, %v451
      %v453 = vcombine.low %v431, %v445
      %v454 = vcombine.high %v431, %v445
      %v455 = vcombine.low %v438, %v452
      %v456 = vcombine.high %v438, %v452
      %v457 = vcombine.low %v134, %v136
      %v458 = vcombine.high %v134, %v136
      %v459 = vcombine.low %v138, %v140
      %v460 = vcombine.high %v138, %v140
      %v462 = vunpack.c.l.s4 1983009808
      %v463 = vunpack.c.0.s8 %v462
      %v464 = vlaneseq
      %v465 = vshrl.u32 %v464, 7
      %v466 = vsub.s32 %v463, %v465
      %v467 = vrot.slane %v457, %v466
      %v469 = vunpack.c.l.s4 1983009808
      %v470 = vunpack.c.0.s8 %v469
      %v471 = vlaneseq
      %v472 = vshrl.u32 %v471, 7
      %v473 = vsub.s32 %v470, %v472
      %v474 = vrot.slane %v458, %v473
      %v476 = vunpack.c.l.s4 1983009808
      %v477 = vunpack.c.0.s8 %v476
      %v478 = vlaneseq
      %v479 = vshrl.u32 %v478, 7
      %v480 = vsub.s32 %v477, %v479
      %v481 = vrot.slane %v459, %v480
      %v483 = vunpack.c.l.s4 1983009808
      %v484 = vunpack.c.0.s8 %v483
      %v485 = vlaneseq
      %v486 = vshrl.u32 %v485, 7
      %v487 = vsub.s32 %v484, %v486
      %v488 = vrot.slane %v460, %v487
      %v489 = vcombine.low %v467, %v481
      %v490 = vcombine.high %v467, %v481
      %v491 = vcombine.low %v474, %v488
      %v492 = vcombine.high %v474, %v488
      %v501 = vsel %vm412, %v453, 0.0
      %v502 = vsel %vm412, %v454, 0.0
      %v503 = vsel %vm412, %v455, 0.0
      %v504 = vsel %vm412, %v456, 0.0
      %v505 = vsel %vm412, %v489, 0.0
      %v506 = vsel %vm412, %v490, 0.0
      %v507 = vsel %vm412, %v491, 0.0
      %v508 = vsel %vm412, %v492, 0.0
      %v517 = vcombine.low %v101, %v103
      %v518 = vcombine.high %v101, %v103
      %v519 = vcombine.low %v105, %v107
      %v520 = vcombine.high %v105, %v107
      %v522 = vunpack.c.l.s4 1983009808
      %v523 = vunpack.c.0.s8 %v522
      %v524 = vlaneseq
      %v525 = vshrl.u32 %v524, 7
      %v526 = vsub.s32 %v523, %v525
      %v527 = vrot.slane %v517, %v526
      %v529 = vunpack.c.l.s4 1983009808
      %v530 = vunpack.c.0.s8 %v529
      %v531 = vlaneseq
      %v532 = vshrl.u32 %v531, 7
      %v533 = vsub.s32 %v530, %v532
      %v534 = vrot.slane %v518, %v533
      %v536 = vunpack.c.l.s4 1983009808
      %v537 = vunpack.c.0.s8 %v536
      %v538 = vlaneseq
      %v539 = vshrl.u32 %v538, 7
      %v540 = vsub.s32 %v537, %v539
      %v541 = vrot.slane %v519, %v540
      %v543 = vunpack.c.l.s4 1983009808
      %v544 = vunpack.c.0.s8 %v543
      %v545 = vlaneseq
      %v546 = vshrl.u32 %v545, 7
      %v547 = vsub.s32 %v544, %v546
      %v548 = vrot.slane %v520, %v547
      %v549 = vcombine.low %v527, %v541
      %v550 = vcombine.high %v527, %v541
      %v551 = vcombine.low %v534, %v548
      %v552 = vcombine.high %v534, %v548
      %v553 = vcombine.low %v102, %v104
      %v554 = vcombine.high %v102, %v104
      %v555 = vcombine.low %v106, %v108
      %v556 = vcombine.high %v106, %v108
      %v558 = vunpack.c.l.s4 1983009808
      %v559 = vunpack.c.0.s8 %v558
      %v560 = vlaneseq
      %v561 = vshrl.u32 %v560, 7
      %v562 = vsub.s32 %v559, %v561
      %v563 = vrot.slane %v553, %v562
      %v565 = vunpack.c.l.s4 1983009808
      %v566 = vunpack.c.0.s8 %v565
      %v567 = vlaneseq
      %v568 = vshrl.u32 %v567, 7
      %v569 = vsub.s32 %v566, %v568
      %v570 = vrot.slane %v554, %v569
      %v572 = vunpack.c.l.s4 1983009808
      %v573 = vunpack.c.0.s8 %v572
      %v574 = vlaneseq
      %v575 = vshrl.u32 %v574, 7
      %v576 = vsub.s32 %v573, %v575
      %v577 = vrot.slane %v555, %v576
      %v579 = vunpack.c.l.s4 1983009808
      %v580 = vunpack.c.0.s8 %v579
      %v581 = vlaneseq
      %v582 = vshrl.u32 %v581, 7
      %v583 = vsub.s32 %v580, %v582
      %v584 = vrot.slane %v556, %v583
      %v585 = vcombine.low %v563, %v577
      %v586 = vcombine.high %v563, %v577
      %v587 = vcombine.low %v570, %v584
      %v588 = vcombine.high %v570, %v584
      %v597 = vsel %vm412, %v549, 0.0
      %v598 = vsel %vm412, %v550, 0.0
      %v599 = vsel %vm412, %v551, 0.0
      %v600 = vsel %vm412, %v552, 0.0
      %v601 = vsel %vm412, %v585, 0.0
      %v602 = vsel %vm412, %v586, 0.0
      %v603 = vsel %vm412, %v587, 0.0
      %v604 = vsel %vm412, %v588, 0.0
      %v605 = vmul.f32 %v501, %v597
      %v606 = vmul.f32 %v502, %v598
      %v607 = vmul.f32 %v503, %v599
      %v608 = vmul.f32 %v504, %v600
      %v609 = vmul.f32 %v505, %v601
      %v610 = vmul.f32 %v506, %v602
      %v611 = vmul.f32 %v507, %v603
      %v612 = vmul.f32 %v508, %v604
      %v613 = vadd.f32 %v501, %v597
      %v614 = vadd.f32 %v502, %v598
      %v615 = vadd.f32 %v503, %v599
      %v616 = vadd.f32 %v504, %v600
      %v617 = vadd.f32 %v505, %v601
      %v618 = vadd.f32 %v506, %v602
      %v619 = vadd.f32 %v507, %v603
      %v620 = vadd.f32 %v508, %v604
      %v621 = vld [vmem:[#allocation2] sm:$0xff]
      %v622 = vld [vmem:[#allocation2 + $0x8] sm:$0xff]
      %v623 = vld [vmem:[#allocation2 + $0x10] sm:$0xff]
      %v624 = vld [vmem:[#allocation2 + $0x18] sm:$0xff]
      %v625 = vld [vmem:[#allocation2 + $0x20] sm:$0xff]
      %v626 = vld [vmem:[#allocation2 + $0x28] sm:$0xff]
      %v627 = vld [vmem:[#allocation2 + $0x30] sm:$0xff]
      %v628 = vld [vmem:[#allocation2 + $0x38] sm:$0xff]
      %v629 = vadd.f32 %v605, 0.0
      %v630 = vadd.f32 %v606, 0.0
      %v631 = vadd.f32 %v607, 0.0
      %v632 = vadd.f32 %v608, 0.0
      %v633 = vadd.f32 %v609, 0.0
      %v634 = vadd.f32 %v610, 0.0
      %v635 = vadd.f32 %v611, 0.0
      %v636 = vadd.f32 %v612, 0.0
      %v637 = vadd.f32 %v621, %v629
      %v638 = vadd.f32 %v622, %v630
      %v639 = vadd.f32 %v623, %v631
      %v640 = vadd.f32 %v624, %v632
      %v641 = vadd.f32 %v625, %v633
      %v642 = vadd.f32 %v626, %v634
      %v643 = vadd.f32 %v627, %v635
      %v644 = vadd.f32 %v628, %v636
      %645 = vst [vmem:[#allocation2] sm:$0xff] %v637
      %646 = vst [vmem:[#allocation2 + $0x8] sm:$0xff] %v638
      %647 = vst [vmem:[#allocation2 + $0x10] sm:$0xff] %v639
      %648 = vst [vmem:[#allocation2 + $0x18] sm:$0xff] %v640
      %649 = vst [vmem:[#allocation2 + $0x20] sm:$0xff] %v641
      %650 = vst [vmem:[#allocation2 + $0x28] sm:$0xff] %v642
      %651 = vst [vmem:[#allocation2 + $0x30] sm:$0xff] %v643
      %652 = vst [vmem:[#allocation2 + $0x38] sm:$0xff] %v644
      %v653 = vld [vmem:[#allocation3] sm:$0xff]
      %v654 = vld [vmem:[#allocation3 + $0x8] sm:$0xff]
      %v655 = vld [vmem:[#allocation3 + $0x10] sm:$0xff]
      %v656 = vld [vmem:[#allocation3 + $0x18] sm:$0xff]
      %v657 = vld [vmem:[#allocation3 + $0x20] sm:$0xff]
      %v658 = vld [vmem:[#allocation3 + $0x28] sm:$0xff]
      %v659 = vld [vmem:[#allocation3 + $0x30] sm:$0xff]
      %v660 = vld [vmem:[#allocation3 + $0x38] sm:$0xff]
      %v661 = vadd.f32 %v613, 0.0
      %v662 = vadd.f32 %v614, 0.0
      %v663 = vadd.f32 %v615, 0.0
      %v664 = vadd.f32 %v616, 0.0
      %v665 = vadd.f32 %v617, 0.0
      %v666 = vadd.f32 %v618, 0.0
      %v667 = vadd.f32 %v619, 0.0
      %v668 = vadd.f32 %v620, 0.0
      %v669 = vadd.f32 %v653, %v661
      %v670 = vadd.f32 %v654, %v662
      %v671 = vadd.f32 %v655, %v663
      %v672 = vadd.f32 %v656, %v664
      %v673 = vadd.f32 %v657, %v665
      %v674 = vadd.f32 %v658, %v666
      %v675 = vadd.f32 %v659, %v667
      %v676 = vadd.f32 %v660, %v668
      %677 = vst [vmem:[#allocation3] sm:$0xff] %v669
      %678 = vst [vmem:[#allocation3 + $0x8] sm:$0xff] %v670
      %679 = vst [vmem:[#allocation3 + $0x10] sm:$0xff] %v671
      %680 = vst [vmem:[#allocation3 + $0x18] sm:$0xff] %v672
      %681 = vst [vmem:[#allocation3 + $0x20] sm:$0xff] %v673
      %682 = vst [vmem:[#allocation3 + $0x28] sm:$0xff] %v674
      %683 = vst [vmem:[#allocation3 + $0x30] sm:$0xff] %v675
      %684 = vst [vmem:[#allocation3 + $0x38] sm:$0xff] %v676
    $region29: #{tpu_custom_call.1} parent=1 // pred_fallthru
      _
    // Predicated region
    $region30: #{tpu_custom_call.1} parent=1 // pred_check
      %p685 = pneg %p73
    $region31: #{tpu_custom_call.1} parent=1 // pred_check_branch
      %687 = sbr.rel (%p685) target = $region33
    $region32: #{tpu_custom_call.1} parent=1 // pred_region
      %v688 = vld [vmem:[#allocation2] sm:$0xff]
      %v689 = vld [vmem:[#allocation2 + $0x8] sm:$0xff]
      %v690 = vld [vmem:[#allocation2 + $0x10] sm:$0xff]
      %v691 = vld [vmem:[#allocation2 + $0x18] sm:$0xff]
      %v692 = vld [vmem:[#allocation2 + $0x20] sm:$0xff]
      %v693 = vld [vmem:[#allocation2 + $0x28] sm:$0xff]
      %v694 = vld [vmem:[#allocation2 + $0x30] sm:$0xff]
      %v695 = vld [vmem:[#allocation2 + $0x38] sm:$0xff]
      %v696 = vadd.f32 %v688, %v689
      %v697 = vadd.f32 %v696, %v690
      %v698 = vadd.f32 %v697, %v691
      %v699 = vadd.f32 %v698, %v692
      %v700 = vadd.f32 %v699, %v693
      %v701 = vadd.f32 %v700, %v694
      %v702 = vadd.f32 %v701, %v695
      %703 = vadd.xlane.f32.xlu0 %v702
      %v704 = vpop.xlane.xlu0 %703
      %v705 = vrot.slane %v704, 4
      %v706 = vadd.f32 %v704, %v705
      %v707 = vrot.slane %v706, 2
      %v708 = vadd.f32 %v706, %v707
      %v709 = vrot.slane %v708, 1
      %v710 = vadd.f32 %v708, %v709
      %s711 = vtos %v710
      %v712 = vstv %s711
      %vm713 = vcmask 0
      %714 = vst.msk [vmem:[#allocation9] sm:$0x1] %vm713, %v712
      %v715 = vld [vmem:[#allocation3] sm:$0xff]
      %v716 = vld [vmem:[#allocation3 + $0x8] sm:$0xff]
      %v717 = vld [vmem:[#allocation3 + $0x10] sm:$0xff]
      %v718 = vld [vmem:[#allocation3 + $0x18] sm:$0xff]
      %v719 = vld [vmem:[#allocation3 + $0x20] sm:$0xff]
      %v720 = vld [vmem:[#allocation3 + $0x28] sm:$0xff]
      %v721 = vld [vmem:[#allocation3 + $0x30] sm:$0xff]
      %v722 = vld [vmem:[#allocation3 + $0x38] sm:$0xff]
      %v723 = vadd.f32 %v715, %v716
      %v724 = vadd.f32 %v723, %v717
      %v725 = vadd.f32 %v724, %v718
      %v726 = vadd.f32 %v725, %v719
      %v727 = vadd.f32 %v726, %v720
      %v728 = vadd.f32 %v727, %v721
      %v729 = vadd.f32 %v728, %v722
      %730 = vadd.xlane.f32.xlu0 %v729
      %v731 = vpop.xlane.xlu0 %730
      %v732 = vrot.slane %v731, 4
      %v733 = vadd.f32 %v731, %v732
      %v734 = vrot.slane %v733, 2
      %v735 = vadd.f32 %v733, %v734
      %v736 = vrot.slane %v735, 1
      %v737 = vadd.f32 %v735, %v736
      %s738 = vtos %v737
      %v739 = vstv %s738
      %740 = vst.msk [vmem:[#allocation10] sm:$0x1] %vm713, %v739
    $region33: #{tpu_custom_call.1} parent=1 // pred_fallthru
      _
    // Predicated region
    $region34: #{tpu_custom_call.1} parent=1 // pred_check
      _
    $region35: #{tpu_custom_call.1} parent=1 // pred_check_branch
      %742 = sbr.rel (0) target = $region37
    $region36: #{tpu_custom_call.1} parent=1 // pred_region
      %s744 = ssub.s32 16, 16
      %745 = vsyncadd [#allocation6], %s744
      %s747 = sshll.u32 [#allocation9], 4
      %s748 = int_to_ptr.vmem [resolvable:$true] %s747
      %750 = dma.vmem_to_hbm [thread:$0]  %s748, 16, %s2, [#allocation6]
    $region37: #{tpu_custom_call.1} parent=1 // pred_fallthru
      _
    // Predicated region
    $region38: #{tpu_custom_call.1} parent=1 // pred_check
      _
    $region39: #{tpu_custom_call.1} parent=1 // pred_check_branch
      %752 = sbr.rel (0) target = $region41
    $region40: #{tpu_custom_call.1} parent=1 // pred_region
      %s754 = ssub.s32 16, 16
      %755 = vsyncadd [#allocation11], %s754
      %s757 = sshll.u32 [#allocation10], 4
      %s758 = int_to_ptr.vmem [resolvable:$true] %s757
      %760 = dma.vmem_to_hbm [thread:$0]  %s758, 16, %s3, [#allocation11]
    $region41: #{tpu_custom_call.1} parent=1 // pred_fallthru
      _
    // Predicated region
    $region42: #{tpu_custom_call.1} parent=1 // pred_check
      _
    $region43: #{tpu_custom_call.1} parent=1 // pred_check_branch
      %762 = sbr.rel (0) target = $region45
    $region44: #{tpu_custom_call.1} parent=1 // pred_region
      %763 = dma.done [#allocation6], 16
    $region45: #{tpu_custom_call.1} parent=1 // pred_fallthru
      _
    // Predicated region
    $region46: #{tpu_custom_call.1} parent=1 // pred_check
      _
    $region47: #{tpu_custom_call.1} parent=1 // pred_check_branch
      %765 = sbr.rel (0) target = $region49
    $region48: #{tpu_custom_call.1} parent=1 // pred_region
      %766 = dma.done [#allocation11], 16
    $region49: #{tpu_custom_call.1} parent=1 // pred_fallthru
      _
    %767 = vsyncpa [#allocation5], 1
    %768 = vsyncpa [#allocation8], 1
    %769 = vsyncpa [#allocation6], 1
    %770 = vsyncpa [#allocation11], 1

</llo_original>
